<compile_context>
chip_gen: v6e
topology: v6e:2x2x1
jax: 0.10.0
libtpu: 0.0.40
codegen_flags: <defaults>
</compile_context>

<pallas_src>
import functools

import jax
import jax.numpy as jnp
from jax import lax
from jax.experimental import pallas as pl
from jax.experimental.pallas import tpu as pltpu

ALPHA = 0.25
GAMMA = 2.0

LANES = 128
MAX_ROW_BLOCK = 8192        # 8192 x 128 f32 = 4 MiB per input tile
MIN_ROWS_TWO_PARTS = 1024   # shard across both v7x TensorCores above 128K elems


def _round_up(x, m):
    return (x + m - 1) // m * m


def _sublane_align(dtype):
    # Sub-32-bit dtypes pack along sublanes; keep row blocks a multiple of the
    # packed-sublane granule so Mosaic gets a native layout.
    return 8 * max(1, 4 // jnp.dtype(dtype).itemsize)


def _focal_terms(x, t, gamma):
    """Per-element (1 - pt)**gamma * bce in f32 (alpha NOT applied)."""
    x = x.astype(jnp.float32)
    t = t.astype(jnp.float32)
    bce = jnp.maximum(x, 0.0) - x * t + jnp.log1p(jnp.exp(-jnp.abs(x)))
    pt = jnp.exp(-bce)
    return (1.0 - pt) ** gamma * bce


def _focal_loss_kernel(x_ref, t_ref, out_ref, acc_ref, *, gamma, row_block,
                       blocks_per_part, blocks_total, valid_rows_last,
                       hard_targets, has_dead_blocks):
    p = pl.program_id(0)
    i = pl.program_id(1)
    g = p * blocks_per_part + i                     # global block id

    @pl.when(i == 0)
    def _init():
        acc_ref[...] = jnp.zeros_like(acc_ref)

    def _accumulate():
        x = x_ref[...].astype(jnp.float32)
        t = t_ref[...].astype(jnp.float32)

        if hard_targets:
            # t in {0,1}: pt = sigmoid((2t-1)x), bce = -log(pt).
            # 2 EUP transcendentals + 1 approx reciprocal (vs 3 transcendentals).
            z = (2.0 * t - 1.0) * x
            e = jnp.exp(-jnp.abs(z))
            bce = jnp.maximum(-z, 0.0) + jnp.log1p(e)
            pt = jnp.where(z >= 0.0, 1.0, e) * pl.reciprocal(1.0 + e, approx=True)
        else:
            # General (soft-label capable), numerically stable BCE-with-logits.
            bce = jnp.maximum(x, 0.0) - x * t + jnp.log1p(jnp.exp(-jnp.abs(x)))
            pt = jnp.exp(-bce)

        one_m_pt = 1.0 - pt
        if float(gamma) == 2.0:
            mod = jnp.square(one_m_pt)              # avoid pow -> exp/log on EUP
        elif float(gamma) == float(int(gamma)) and int(gamma) >= 0:
            mod = lax.integer_pow(one_m_pt, int(gamma))
        else:
            mod = one_m_pt ** gamma
        loss = mod * bce                            # alpha / 1/N hoisted outside

        def _add(vals):
            # vreg-shaped accumulator: cheap VPU adds per step; the single
            # cross-lane reduce happens once in the wrapper.
            acc_ref[...] += vals.reshape(row_block // 8, 8, LANES).sum(axis=0)

        if valid_rows_last == row_block:
            _add(loss)
        else:
            # Only the single ragged last block needs a row mask.
            @pl.when(g == blocks_total - 1)
            def _ragged():
                row_ids = lax.broadcasted_iota(jnp.int32, (row_block, LANES), 0)
                _add(jnp.where(row_ids < valid_rows_last, loss, 0.0))

            @pl.when(g != blocks_total - 1)
            def _full():
                _add(loss)

    if has_dead_blocks:
        # Grid rounding leaves <= n_part-1 trailing dead blocks; their input
        # index is clamped (re-reads the last real block) and their sum skipped.
        pl.when(g < blocks_total)(_accumulate)
    else:
        _accumulate()

    @pl.when(i == blocks_per_part - 1)
    def _finalize():
        out_ref[...] = acc_ref[...].reshape(1, 8, LANES)


def focal_loss(inputs, targets, alpha=ALPHA, gamma=GAMMA, *,
               hard_targets=False, max_row_block=MAX_ROW_BLOCK,
               min_rows_two_parts=MIN_ROWS_TWO_PARTS):
    """Pallas TPU focal-loss forward. Returns a scalar f32 (mean reduction).

    hard_targets=True selects a cheaper 2-transcendental pt path that is only
    exact for targets in {0, 1}; the default keeps the general soft-label math.
    """
    assert inputs.shape == targets.shape
    n_elem = inputs.size
    x_flat = inputs.reshape(-1)
    t_flat = targets.reshape(-1)

    rows = n_elem // LANES
    rem = n_elem - rows * LANES

    # Tiny inputs: not worth a kernel launch.
    if rows < 8:
        return (jnp.float32(alpha) * jnp.sum(_focal_terms(x_flat, t_flat, gamma))
                / jnp.float32(n_elem))

    # The <128-element ragged tail is evaluated in XLA, so 128-aligned inputs
    # need no wrapper-side pad/copy at all.
    if rem:
        # TODO(synk): the prefix slice still copies the bulk once for
        # non-multiple-of-128 sizes; a fully copy-free path would need a
        # manual-DMA (memory_space=pl.ANY) kernel.
        x_main, t_main = x_flat[: rows * LANES], t_flat[: rows * LANES]
        tail = jnp.sum(_focal_terms(x_flat[rows * LANES:],
                                    t_flat[rows * LANES:], gamma))
    else:
        x_main, t_main = x_flat, t_flat
        tail = jnp.float32(0.0)

    # Narrow dtypes stream as-is (kernel upcasts); keep the row block a
    # multiple of their sublane-packing granule.
    align = max(_sublane_align(x_main.dtype), _sublane_align(t_main.dtype))
    if rows < align:
        x_main = x_main.astype(jnp.float32)
        t_main = t_main.astype(jnp.float32)
        align = 8
    x2 = x_main.reshape(rows, LANES)
    t2 = t_main.reshape(rows, LANES)

    # 2-way leading "parallel" split whenever there is enough work for both
    # v7x TensorCores (a harmless serial loop on 1-TC chips), independent of
    # the row-block size.
    n_part = 2 if rows >= min_rows_two_parts else 1
    # Big blocks (up to 4 MiB/input/step) amortise the ~0.35us per-step
    # overhead; sized from `rows` so grid rounding never adds more than one
    # block of slack, and capped so block starts stay inside the array.
    row_block = min(max_row_block, _round_up(pl.cdiv(rows, n_part), align))
    row_block = min(row_block, (rows // align) * align)

    blocks_total = pl.cdiv(rows, row_block)
    blocks_per_part = pl.cdiv(blocks_total, n_part)
    has_dead_blocks = n_part * blocks_per_part != blocks_total
    valid_rows_last = rows - (blocks_total - 1) * row_block

    if has_dead_blocks:
        def in_index_map(p, i):
            return (jnp.minimum(p * blocks_per_part + i, blocks_total - 1), 0)
    else:
        def in_index_map(p, i):
            return (p * blocks_per_part + i, 0)

    kernel = functools.partial(
        _focal_loss_kernel, gamma=gamma, row_block=row_block,
        blocks_per_part=blocks_per_part, blocks_total=blocks_total,
        valid_rows_last=valid_rows_last, hard_targets=hard_targets,
        has_dead_blocks=has_dead_blocks)

    in_bytes = rows * LANES * (x2.dtype.itemsize + t2.dtype.itemsize)
    cost = pl.CostEstimate(
        flops=12 * rows * LANES,
        transcendentals=(2 if hard_targets else 3) * rows * LANES,
        bytes_accessed=in_bytes + n_part * 8 * LANES * 4)

    in_tile_bytes = row_block * LANES * (x2.dtype.itemsize + t2.dtype.itemsize)
    vmem_limit = min(64 * 1024 * 1024,
                     max(32 * 1024 * 1024, 2 * in_tile_bytes + (8 << 20)))

    partial = pl.pallas_call(
        kernel,
        out_shape=jax.ShapeDtypeStruct((n_part, 8, LANES), jnp.float32),
        grid_spec=pltpu.PrefetchScalarGridSpec(
            num_scalar_prefetch=0,
            grid=(n_part, blocks_per_part),
            in_specs=[
                pl.BlockSpec((row_block, LANES), in_index_map),
                pl.BlockSpec((row_block, LANES), in_index_map),
            ],
            out_specs=pl.BlockSpec((1, 8, LANES), lambda p, i: (p, 0, 0)),
            scratch_shapes=[pltpu.VMEM((8, LANES), jnp.float32)],
        ),
        compiler_params=pltpu.CompilerParams(
            dimension_semantics=("parallel", "arbitrary"),
            vmem_limit_bytes=vmem_limit),
        cost_estimate=cost,
    )(x2, t2)

    total = jnp.sum(partial, dtype=jnp.float32) + tail
    # alpha and 1/N folded in once, outside the kernel.
    return total * jnp.float32(alpha) / jnp.float32(n_elem)


def focal_loss_ref(inputs, targets, alpha=ALPHA, gamma=GAMMA):
    # Matches the PyTorch module exactly: uniform alpha (NOT alpha_t).
    x = inputs.astype(jnp.float32)
    t = targets.astype(jnp.float32)
    bce = jnp.maximum(x, 0.0) - x * t + jnp.log1p(jnp.exp(-jnp.abs(x)))
    pt = jnp.exp(-bce)
    return jnp.mean(alpha * (1.0 - pt) ** gamma * bce)


if __name__ == "__main__":
    key = jax.random.PRNGKey(0)
    k_x, k_t = jax.random.split(key)

    # (A) Small, 128-aligned shape (per-pixel binary classification head).
    x = jax.random.normal(k_x, (2, 4, 16, 16), dtype=jnp.float32)            # logits
    t = jax.random.bernoulli(k_t, 0.3, (2, 4, 16, 16)).astype(jnp.float32)   # targets
    loss = focal_loss(x, t)
    jax.block_until_ready(loss)
    ref = focal_loss_ref(x, t)
    assert jnp.allclose(loss, ref, rtol=1e-5, atol=1e-6), (loss, ref)

    # (B) Non-multiple-of-128 element count: ragged last block + XLA tail.
    xb = jax.random.normal(k_x, (2, 3, 17, 13), dtype=jnp.float32)
    tb = jax.random.bernoulli(k_t, 0.3, (2, 3, 17, 13)).astype(jnp.float32)
    lb = focal_loss(xb, tb)
    jax.block_until_ready(lb)
    rb = focal_loss_ref(xb, tb)
    assert jnp.allclose(lb, rb, rtol=1e-5, atol=1e-6), (lb, rb)

    # (C) Larger shape: 2-way TensorCore split, fully copy-free path.
    xc = jax.random.normal(k_x, (8, 16, 64, 64), dtype=jnp.float32)
    tc = jax.random.bernoulli(k_t, 0.3, (8, 16, 64, 64)).astype(jnp.float32)
    lc = focal_loss(xc, tc)
    jax.block_until_ready(lc)
    rc = focal_loss_ref(xc, tc)
    assert jnp.allclose(lc, rc, rtol=1e-5, atol=1e-6), (lc, rc)

    # (D) Odd block count (small row-block override): exercises the dead-block
    #     clamp/skip path and multi-block accumulation per partition.
    xd = jax.random.normal(k_x, (6, 8, 64, 128), dtype=jnp.float32)
    td = jax.random.bernoulli(k_t, 0.3, (6, 8, 64, 128)).astype(jnp.float32)
    ld = focal_loss(xd, td, max_row_block=1024)
    jax.block_until_ready(ld)
    rd = focal_loss_ref(xd, td)
    assert jnp.allclose(ld, rd, rtol=1e-5, atol=1e-6), (ld, rd)

    # (E) Hard-target fast path (2 transcendentals + approx reciprocal).
    le = focal_loss(x, t, hard_targets=True)
    jax.block_until_ready(le)
    assert jnp.allclose(le, ref, rtol=1e-3, atol=1e-5), (le, ref)

    # (F) Narrow input dtype passes straight through (no wrapper upcast).
    xf = x.astype(jnp.bfloat16)
    lf = focal_loss(xf, t)
    jax.block_until_ready(lf)
    rf = focal_loss_ref(xf, t)
    assert jnp.allclose(lf, rf, rtol=1e-5, atol=1e-6), (lf, rf)

    print("KERNEL_OK")
</pallas_src>

<mosaic_0001>
module attributes {stable_mosaic.version = 11 : i64} {
  func.func @_focal_loss_kernel(%arg0: i32, %arg1: i32, %arg2: memref<16x128xf32, #tpu.memory_space<vmem>>, %arg3: memref<16x128xf32, #tpu.memory_space<vmem>>, %arg4: memref<1x8x128xf32, #tpu.memory_space<vmem>>, %arg5: memref<8x128xf32, #tpu.memory_space<vmem>>) attributes {dimension_semantics = [#tpu.dimension_semantics<parallel>, #tpu.dimension_semantics<arbitrary>], iteration_bounds = array<i64: 1, 1>, scalar_prefetch = 0 : i64, scratch_operands = 1 : i64, tpu.core_type = #tpu.core_type<tc>, window_params = [{transform_indices = @transform_0, window_bounds = array<i64: 16, 128>}, {transform_indices = @transform_1, window_bounds = array<i64: 16, 128>}, {transform_indices = @transform_2, window_bounds = array<i64: 1, 8, 128>}]} {
    %c0_i32 = arith.constant 0 : i32
    %0 = arith.cmpi eq, %arg1, %c0_i32 : i32
    %1 = arith.extui %0 : i1 to i32
    %c0_i32_0 = arith.constant 0 : i32
    %2 = arith.cmpi ne, %1, %c0_i32_0 : i32
    scf.if %2 {
      %cst_14 = arith.constant 0.000000e+00 : f32
      %30 = vector.broadcast %cst_14 : f32 to vector<8x128xf32>
      %c0_15 = arith.constant 0 : index
      %c0_16 = arith.constant 0 : index
      %31 = vector.load %arg5[%c0_15, %c0_16] : memref<8x128xf32, #tpu.memory_space<vmem>>, vector<8x128xf32>
      tpu.vector_store %arg5[%c0_15, %c0_16], %30 {strides = array<i32>} : memref<8x128xf32, #tpu.memory_space<vmem>>, vector<8x128xf32>,
    } else {
    }
    %c0 = arith.constant 0 : index
    %c0_1 = arith.constant 0 : index
    %3 = vector.load %arg2[%c0, %c0_1] : memref<16x128xf32, #tpu.memory_space<vmem>>, vector<16x128xf32>
    %c0_2 = arith.constant 0 : index
    %c0_3 = arith.constant 0 : index
    %4 = vector.load %arg3[%c0_2, %c0_3] : memref<16x128xf32, #tpu.memory_space<vmem>>, vector<16x128xf32>
    %cst = arith.constant 0.000000e+00 : f32
    %5 = vector.broadcast %cst : f32 to vector<16x128xf32>
    %6 = arith.maximumf %3, %5 : vector<16x128xf32>
    %7 = arith.mulf %3, %4 : vector<16x128xf32>
    %8 = arith.subf %6, %7 : vector<16x128xf32>
    %9 = math.absf %3 : vector<16x128xf32>
    %cst_4 = arith.constant 0.000000e+00 : f32
    %10 = vector.broadcast %cst_4 : f32 to vector<16x128xf32>
    %11 = arith.subf %10, %9 : vector<16x128xf32>
    %12 = math.exp %11 : vector<16x128xf32>
    %13 = math.log1p %12 : vector<16x128xf32>
    %14 = arith.addf %8, %13 : vector<16x128xf32>
    %cst_5 = arith.constant 0.000000e+00 : f32
    %15 = vector.broadcast %cst_5 : f32 to vector<16x128xf32>
    %16 = arith.subf %15, %14 : vector<16x128xf32>
    %17 = math.exp %16 : vector<16x128xf32>
    %cst_6 = arith.constant 1.000000e+00 : f32
    %18 = vector.broadcast %cst_6 : f32 to vector<16x128xf32>
    %19 = arith.subf %18, %17 : vector<16x128xf32>
    %20 = arith.mulf %19, %19 : vector<16x128xf32>
    %21 = arith.mulf %20, %14 : vector<16x128xf32>
    %c0_7 = arith.constant 0 : index
    %c0_8 = arith.constant 0 : index
    %22 = vector.load %arg5[%c0_7, %c0_8] : memref<8x128xf32, #tpu.memory_space<vmem>>, vector<8x128xf32>
    %23 = vector.shape_cast %21 : vector<16x128xf32> to vector<2x8x128xf32>
    %cst_9 = arith.constant dense<0.000000e+00> : vector<8x128xf32>
    %24 = vector.multi_reduction <add>, %23, %cst_9 [0] : vector<2x8x128xf32> to vector<8x128xf32>
    %25 = arith.addf %22, %24 : vector<8x128xf32>
    %c0_10 = arith.constant 0 : index
    %c0_11 = arith.constant 0 : index
    %26 = vector.load %arg5[%c0_10, %c0_11] : memref<8x128xf32, #tpu.memory_space<vmem>>, vector<8x128xf32>
    tpu.vector_store %arg5[%c0_10, %c0_11], %25 {strides = array<i32>} : memref<8x128xf32, #tpu.memory_space<vmem>>, vector<8x128xf32>,
    %c0_i32_12 = arith.constant 0 : i32
    %27 = arith.cmpi eq, %arg1, %c0_i32_12 : i32
    %28 = arith.extui %27 : i1 to i32
    %c0_i32_13 = arith.constant 0 : i32
    %29 = arith.cmpi ne, %28, %c0_i32_13 : i32
    scf.if %29 {
      %c0_14 = arith.constant 0 : index
      %c0_15 = arith.constant 0 : index
      %30 = vector.load %arg5[%c0_14, %c0_15] : memref<8x128xf32, #tpu.memory_space<vmem>>, vector<8x128xf32>
      %31 = vector.shape_cast %30 : vector<8x128xf32> to vector<1x8x128xf32>
      %c0_16 = arith.constant 0 : index
      %c0_17 = arith.constant 0 : index
      %c0_18 = arith.constant 0 : index
      %32 = vector.load %arg4[%c0_16, %c0_17, %c0_18] : memref<1x8x128xf32, #tpu.memory_space<vmem>>, vector<1x8x128xf32>
      tpu.vector_store %arg4[%c0_16, %c0_17, %c0_18], %31 {strides = array<i32>} : memref<1x8x128xf32, #tpu.memory_space<vmem>>, vector<1x8x128xf32>,
    } else {
    }
    return
  }
  func.func @transform_0(%arg0: i32, %arg1: i32) -> (i32, i32) {
    %c1_i32 = arith.constant 1 : i32
    %0 = arith.muli %arg0, %c1_i32 : i32
    %1 = arith.addi %0, %arg1 : i32
    %c0_i32 = arith.constant 0 : i32
    %c0_i32_0 = arith.constant 0 : i32
    return %1, %c0_i32 : i32, i32
  }
  func.func @transform_1(%arg0: i32, %arg1: i32) -> (i32, i32) {
    %c1_i32 = arith.constant 1 : i32
    %0 = arith.muli %arg0, %c1_i32 : i32
    %1 = arith.addi %0, %arg1 : i32
    %c0_i32 = arith.constant 0 : i32
    %c0_i32_0 = arith.constant 0 : i32
    return %1, %c0_i32 : i32, i32
  }
  func.func @transform_2(%arg0: i32, %arg1: i32) -> (i32, i32, i32) {
    %c0_i32 = arith.constant 0 : i32
    %c0_i32_0 = arith.constant 0 : i32
    %c0_i32_1 = arith.constant 0 : i32
    return %arg0, %c0_i32, %c0_i32_0 : i32, i32, i32
  }
}

</mosaic_0001>

<llo_original>
// kernel: tpu_custom_call.1
$region0: #{tpu_custom_call.1}
  #allocation0 [shape = 'u32[]', space=smem, size = 0x4, offset = 0x4, fixed_abs, tag = 'smem constant byte address 0x4 - core index']
  #allocation1 [shape = 'u32[144,128]{1,0:T(1,128)}', space=vmem, size = 0x12000, scoped, tag = 'internal scratch']
  #allocation2 [shape = 'f32[8,128]{1,0:T(8,128)}', space=vmem, size = 0x1000, scoped, tag = 'scratch operand']
  %s0 = inlined_call_operand.hbm [shape: f32[16,128], index: 0, kind: input, shape index: {}]
  %s1 = inlined_call_operand.hbm [shape: f32[16,128], index: 1, kind: input, shape index: {}]
  %s2 = inlined_call_operand.hbm [shape: f32[1,8,128], index: 2, kind: output, shape index: {}]
  %s3 = sld [smem:[#allocation0]]
  $region34: #{tpu_custom_call.1} parent=0
    _
  %s5 = ssub.s32 1, %s3
  %s6 = scalar_select 0, %s5, %s3
  $region1: #{tpu_custom_call.1} parent=0
    #allocation3 [shape = 'u8[8192]{0}', space=vmem, size = 0x2000, scoped, tag = 'input window, operand 0, single buffered']
    #allocation4 [shape = 's32[1]{0}', space=sflag, size = 0x4, scoped, tag = 'scoped memory for tpu_custom_call.1']
    #allocation5 [shape = 's32[1]{0}', space=sflag, size = 0x4, scoped, tag = 'scoped memory for tpu_custom_call.1']
    #allocation6 [shape = 'u8[8192]{0}', space=vmem, size = 0x2000, scoped, tag = 'input window, operand 1, single buffered']
    #allocation7 [shape = 's32[1]{0}', space=sflag, size = 0x4, scoped, tag = 'scoped memory for tpu_custom_call.1']
    #allocation8 [shape = 'u8[4096]{0}', space=vmem, size = 0x1000, scoped, tag = 'output window, operand 0, single buffered']
    %7 = vsyncpa [#allocation4], 0
    %8 = vsyncpa [#allocation7], 0
    %9 = vsyncpa [#allocation5], 0
    // Predicated region
    $region2: #{tpu_custom_call.1} parent=1 // pred_check
      _
    $region3: #{tpu_custom_call.1} parent=1 // pred_check_branch
      %11 = sbr.rel (0) target = $region5
    $region4: #{tpu_custom_call.1} parent=1 // pred_region
      %s12 = sadd.s32 0, 0
      %s13 = smul.u32 2, %s12
      %s15 = ssub.s32 256, 256
      %16 = vsyncadd [#allocation4], %s15
      %s17 = smul.addr %s13, 128
      %s18 = scalar_lea.hbm %s0, %s17
      %s19 = sshll.u32 [#allocation3], 4
      %s20 = int_to_ptr.vmem [resolvable:$true] %s19
      %25 = dma.hbm_to_vmem [thread:$0]  %s18, 256, %s20, [#allocation4], 128, 128, 8
    $region5: #{tpu_custom_call.1} parent=1 // pred_fallthru
      _
    // Predicated region
    $region6: #{tpu_custom_call.1} parent=1 // pred_check
      _
    $region7: #{tpu_custom_call.1} parent=1 // pred_check_branch
      %27 = sbr.rel (0) target = $region9
    $region8: #{tpu_custom_call.1} parent=1 // pred_region
      %s28 = sadd.s32 0, 0
      %s29 = smul.u32 2, %s28
      %s31 = ssub.s32 256, 256
      %32 = vsyncadd [#allocation7], %s31
      %s33 = smul.addr %s29, 128
      %s34 = scalar_lea.hbm %s1, %s33
      %s35 = sshll.u32 [#allocation6], 4
      %s36 = int_to_ptr.vmem [resolvable:$true] %s35
      %41 = dma.hbm_to_vmem [thread:$0]  %s34, 256, %s36, [#allocation7], 128, 128, 8
    $region9: #{tpu_custom_call.1} parent=1 // pred_fallthru
      _
    // Predicated region
    $region10: #{tpu_custom_call.1} parent=1 // pred_check
      _
    $region11: #{tpu_custom_call.1} parent=1 // pred_check_branch
      %43 = sbr.rel (0) target = $region13
    $region12: #{tpu_custom_call.1} parent=1 // pred_region
      %44 = dma.done [#allocation4], 256
    $region13: #{tpu_custom_call.1} parent=1 // pred_fallthru
      _
    // Predicated region
    $region14: #{tpu_custom_call.1} parent=1 // pred_check
      _
    $region15: #{tpu_custom_call.1} parent=1 // pred_check_branch
      %46 = sbr.rel (0) target = $region17
    $region16: #{tpu_custom_call.1} parent=1 // pred_region
      %47 = dma.done [#allocation7], 256
    $region17: #{tpu_custom_call.1} parent=1 // pred_fallthru
      _
    %s48 = sadd.s32 0, 0
    %s49 = smul.u32 2, %s48
    %s50 = sadd.s32 0, 0
    %s51 = smul.u32 2, %s50
    %p52 = scmp.eq.s32.totalorder 0, 0
    // Predicated region
    $region18: #{tpu_custom_call.1} parent=1 // pred_check
      %p53 = pneg %p52
    $region19: #{tpu_custom_call.1} parent=1 // pred_check_branch
      %55 = sbr.rel (%p53) target = $region21
    $region20: #{tpu_custom_call.1} parent=1 // pred_region
      %56 = vst [vmem:[#allocation2] sm:$0xff] 0.0
    $region21: #{tpu_custom_call.1} parent=1 // pred_fallthru
      _
    %v57 = vld [vmem:[#allocation3] sm:$0xff]
    %v58 = vld [vmem:[#allocation3 + $0x8] sm:$0xff]
    %v59 = vld [vmem:[#allocation6] sm:$0xff]
    %v60 = vld [vmem:[#allocation6 + $0x8] sm:$0xff]
    %v61 = vmax.f32 %v57, 0.0
    %v62 = vmax.f32 %v58, 0.0
    %v63 = vmul.f32 %v57, %v59
    %v64 = vmul.f32 %v58, %v60
    %v65 = vsub.f32 %v61, %v63
    %v66 = vsub.f32 %v62, %v64
    %v67 = vand.u32 2147483647, %v57
    %v68 = vand.u32 2147483647, %v58
    %v69 = vsub.f32 0.0, %v67
    %v70 = vsub.f32 0.0, %v68
    %v71 = vmul.f32 %v69, 1.442695
    %v72 = vpow.pop %v71
    %v73 = vmul.f32 %v70, 1.442695
    %v74 = vpow.pop %v73
    %v75 = vadd.f32 %v72, 1.0
    %v76 = vlog2.pop %v75
    %v77 = vmul.f32 %v76, 0.6931472
    %v78 = vmul.f32 -0.5, %v72
    %v79 = vadd.f32 %v78, 1.0
    %v80 = vmul.f32 %v79, %v72
    %v81 = vand.u32 2147483647, %v72
    %vm82 = vcmp.lt.f32.partialorder %v81, 0.0004427343
    %v83 = vsel %vm82, %v80, %v77
    %v84 = vadd.f32 %v74, 1.0
    %v85 = vlog2.pop %v84
    %v86 = vmul.f32 %v85, 0.6931472
    %v87 = vmul.f32 -0.5, %v74
    %v88 = vadd.f32 %v87, 1.0
    %v89 = vmul.f32 %v88, %v74
    %v90 = vand.u32 2147483647, %v74
    %vm91 = vcmp.lt.f32.partialorder %v90, 0.0004427343
    %v92 = vsel %vm91, %v89, %v86
    %v93 = vadd.f32 %v65, %v83
    %v94 = vadd.f32 %v66, %v92
    %v95 = vsub.f32 0.0, %v93
    %v96 = vsub.f32 0.0, %v94
    %v97 = vmul.f32 %v95, 1.442695
    %v98 = vpow.pop %v97
    %v99 = vmul.f32 %v96, 1.442695
    %v100 = vpow.pop %v99
    %v101 = vsub.f32 1.0, %v98
    %v102 = vsub.f32 1.0, %v100
    %v103 = vmul.f32 %v101, %v101
    %v104 = vmul.f32 %v102, %v102
    %v105 = vmul.f32 %v103, %v93
    %v106 = vmul.f32 %v104, %v94
    %v107 = vld [vmem:[#allocation2] sm:$0xff]
    %v108 = vadd.f32 %v105, %v106
    %v109 = vadd.f32 %v107, %v108
    %110 = vst [vmem:[#allocation2] sm:$0xff] %v109
    // Predicated region
    $region22: #{tpu_custom_call.1} parent=1 // pred_check
      %p111 = pneg %p52
    $region23: #{tpu_custom_call.1} parent=1 // pred_check_branch
      %113 = sbr.rel (%p111) target = $region25
    $region24: #{tpu_custom_call.1} parent=1 // pred_region
      %v114 = vld [vmem:[#allocation2] sm:$0xff]
      %115 = vst [vmem:[#allocation8] sm:$0xff] %v114
    $region25: #{tpu_custom_call.1} parent=1 // pred_fallthru
      _
    // Predicated region
    $region26: #{tpu_custom_call.1} parent=1 // pred_check
      _
    $region27: #{tpu_custom_call.1} parent=1 // pred_check_branch
      %117 = sbr.rel (0) target = $region29
    $region28: #{tpu_custom_call.1} parent=1 // pred_region
      %s119 = ssub.s32 128, 128
      %120 = vsyncadd [#allocation5], %s119
      %s122 = sshll.u32 [#allocation8], 4
      %s123 = int_to_ptr.vmem [resolvable:$true] %s122
      %125 = dma.vmem_to_hbm [thread:$0]  %s123, 128, %s2, [#allocation5]
    $region29: #{tpu_custom_call.1} parent=1 // pred_fallthru
      _
    // Predicated region
    $region30: #{tpu_custom_call.1} parent=1 // pred_check
      _
    $region31: #{tpu_custom_call.1} parent=1 // pred_check_branch
      %127 = sbr.rel (0) target = $region33
    $region32: #{tpu_custom_call.1} parent=1 // pred_region
      %128 = dma.done [#allocation5], 128
    $region33: #{tpu_custom_call.1} parent=1 // pred_fallthru
      _
    %129 = vsyncpa [#allocation4], 1
    %130 = vsyncpa [#allocation7], 1
    %131 = vsyncpa [#allocation5], 1

</llo_original>
